<compile_context>
chip_gen: v5e
topology: v5e:2x2
jax: 0.10.0
libtpu: 0.0.40
codegen_flags: <defaults>
</compile_context>

<pallas_src>
import functools

import jax
import jax.numpy as jnp
from jax.experimental import pallas as pl
from jax.experimental.pallas import tpu as pltpu

_HIGH = jax.lax.Precision.HIGHEST  # only used by the pure-JAX reference


# ----------------------------------------------------------------------------
# Kernel 1: projection  p_c = node_feature @ W_c   (small, gridless, resident)
# ----------------------------------------------------------------------------
def _project_kernel(*refs, n_chunks):
    nf_ref = refs[0]
    w_refs = refs[1:1 + n_chunks]
    p_refs = refs[1 + n_chunks:]
    nf = nf_ref[...]                                   # (N, D) f32
    for w_ref, p_ref in zip(w_refs, p_refs):
        p = jnp.dot(nf, w_ref[...], preferred_element_type=jnp.float32)
        p_ref[...] = p.astype(p_ref.dtype)             # store bf16


# ----------------------------------------------------------------------------
# Kernel 2: row-tiled mixing  out = mix_tile @ pp + bias, then L2-normalize
#   mix_tile : (tm, C) bf16   (C = n_chunks * N;  [w_sub | adj] for bourgain)
#   pp       : (C, O)  bf16   resident ([p1 ; p2])
# ----------------------------------------------------------------------------
def _mix_kernel(mix_ref, pp_ref, b_ref, out_ref, *, normalize_embedding):
    acc = jnp.dot(mix_ref[...], pp_ref[...],
                  preferred_element_type=jnp.float32)  # MXU, f32 accumulate
    out = acc + b_ref[...]                             # bias (1, O) broadcast
    if normalize_embedding:
        # F.normalize(p=2, dim=-1): x / max(||x||_2, 1e-12)
        ssq = jnp.sum(out * out, axis=-1, keepdims=True)
        out = out * jax.lax.rsqrt(jnp.maximum(ssq, 1e-24))
    out_ref[...] = out.astype(out_ref.dtype)


def _pick_block_rows(n, cols, budget_bytes=8 * 1024 * 1024):
    """Largest row tile (multiple of 8, divides N) whose double-buffered bf16
    mixing tile stays within budget (safe for v7x's smaller VMEM)."""
    for tm in (1024, 512, 256, 128, 64, 32, 16, 8):
        if tm <= n and n % tm == 0 and 2 * tm * cols * 2 <= budget_bytes:
            return tm
    return n  # tiny / odd N: single block


# ----------------------------------------------------------------------------
# Wrapper
# ----------------------------------------------------------------------------
def graphconv_bourgain(node_feature_raw, adj, subset_dists, subset_ids,
                       weight, bias, *, concat_bourgain=True,
                       normalize_embedding=True, block_rows=None):
    """node_feature_raw: (N, 1, D); adj: (N, N); subset_dists: (N, K, 1);
    subset_ids: (N, K); weight: (D*(1+concat_bourgain), O); bias: (O,)."""
    nf = jnp.squeeze(node_feature_raw, axis=1).astype(jnp.float32)   # (N, D)
    n, d = nf.shape
    o = weight.shape[1]
    n_chunks = 2 if concat_bourgain else 1
    assert weight.shape[0] == n_chunks * d

    weight = weight.astype(jnp.float32)
    w_chunks = [weight[c * d:(c + 1) * d, :] for c in range(n_chunks)]

    # --- projection kernel (project-then-mix reorder) ------------------------
    vmem = pl.BlockSpec(memory_space=pltpu.MemorySpace.VMEM)
    p_chunks = pl.pallas_call(
        functools.partial(_project_kernel, n_chunks=n_chunks),
        out_shape=tuple(jax.ShapeDtypeStruct((n, o), jnp.bfloat16)
                        for _ in range(n_chunks)),
        in_specs=[vmem] * (1 + n_chunks),
        out_specs=tuple(vmem for _ in range(n_chunks)),
    )(nf, *w_chunks)

    # --- build the (N, n_chunks*N) bf16 mixing matrix in the XLA wrapper -----
    adj_bf = adj.astype(jnp.bfloat16)
    if concat_bourgain:
        ids = subset_ids.astype(jnp.int32)                              # (N, K)
        dists = jnp.squeeze(subset_dists, axis=-1).astype(jnp.float32)  # (N, K)
        k = ids.shape[1]
        # w_sub[i, m] = (1/K) * sum_k [ids[i,k] == m] / (dists[i,k] + 1)
        scale = (1.0 / k) / (dists + 1.0)
        rows = jnp.broadcast_to(jnp.arange(n, dtype=jnp.int32)[:, None],
                                ids.shape)
        w_sub = jnp.zeros((n, n), jnp.float32).at[rows, ids].add(scale)
        mix = jnp.concatenate([w_sub.astype(jnp.bfloat16), adj_bf], axis=1)
        pp = jnp.concatenate([p_chunks[0], p_chunks[1]], axis=0)        # (2N,O)
    else:
        mix = adj_bf
        pp = p_chunks[0]

    bias2d = bias.reshape(1, o).astype(jnp.float32)
    cols = mix.shape[1]

    # --- row-tiled mixing kernel ---------------------------------------------
    if block_rows is not None and n % block_rows == 0 and block_rows % 8 == 0:
        tm = block_rows
    else:
        tm = _pick_block_rows(n, cols)
    grid = (n // tm,)

    out = pl.pallas_call(
        functools.partial(_mix_kernel, normalize_embedding=normalize_embedding),
        out_shape=jax.ShapeDtypeStruct((n, o), jnp.float32),
        grid_spec=pltpu.PrefetchScalarGridSpec(
            num_scalar_prefetch=0,
            grid=grid,
            in_specs=[
                pl.BlockSpec((tm, cols), lambda i: (i, 0)),      # mixing tile
                pl.BlockSpec((pp.shape[0], o), lambda i: (0, 0)),  # resident
                pl.BlockSpec((1, o), lambda i: (0, 0)),            # resident
            ],
            out_specs=pl.BlockSpec((tm, o), lambda i: (i, 0)),
        ),
        compiler_params=pltpu.CompilerParams(
            dimension_semantics=("parallel",)),  # v7x: shard rows over both TCs
    )(mix, pp, bias2d)
    return out


# ----------------------------------------------------------------------------
# Pure-JAX reference (f32, HIGHEST precision) for verification
# ----------------------------------------------------------------------------
def _reference(node_feature_raw, adj, subset_dists, subset_ids, weight, bias):
    nf = jnp.squeeze(node_feature_raw, axis=1)
    y = jnp.matmul(adj, nf, precision=_HIGH)
    sf = nf[subset_ids.reshape(-1), :].reshape(
        subset_ids.shape[0], subset_ids.shape[1], nf.shape[1])
    sf = sf / (subset_dists + 1.0)
    sf = jnp.mean(sf, axis=1)
    y = jnp.concatenate([sf, y], axis=-1)
    y = jnp.matmul(y, weight, precision=_HIGH) + bias
    y = y / jnp.maximum(jnp.linalg.norm(y, axis=-1, keepdims=True), 1e-12)
    return y


if __name__ == "__main__":
    N, D, K, O = 256, 32, 8, 16          # nodes, input_dim, subset size, output_dim
    key = jax.random.PRNGKey(0)
    k_nf, k_adj, k_ids, k_dst, k_w = jax.random.split(key, 5)

    node_feature_raw = jax.random.normal(k_nf, (N, 1, D), dtype=jnp.float32)
    adj = jax.random.bernoulli(k_adj, 0.2, (N, N)).astype(jnp.float32)
    subset_ids = jax.random.randint(k_ids, (N, K), 0, N, dtype=jnp.int32)
    subset_dists = jax.random.uniform(k_dst, (N, K, 1), dtype=jnp.float32,
                                      minval=0.0, maxval=5.0)

    # Parameters (deterministic): xavier_uniform with relu gain, zero bias.
    in_dim = D * 2                       # input_dim * (concat_self + concat_bourgain + 1)
    gain = jnp.sqrt(2.0)                 # calculate_gain('relu')
    bound = gain * jnp.sqrt(6.0 / (in_dim + O))
    weight = jax.random.uniform(k_w, (in_dim, O), dtype=jnp.float32,
                                minval=-bound, maxval=bound)
    bias = jnp.zeros((O,), dtype=jnp.float32)

    out = graphconv_bourgain(node_feature_raw, adj, subset_dists, subset_ids,
                             weight, bias, concat_bourgain=True,
                             normalize_embedding=True, block_rows=64)
    out = jax.block_until_ready(out)

    ref = jax.block_until_ready(
        _reference(node_feature_raw, adj, subset_dists, subset_ids, weight, bias))

    assert out.shape == (N, O)
    assert bool(jnp.all(jnp.isfinite(out)))
    assert bool(jnp.allclose(out, ref, atol=1e-2, rtol=1e-2)), "mismatch vs reference"
    print("KERNEL_OK")
</pallas_src>

<mosaic_0001>
module attributes {stable_mosaic.version = 11 : i64} {
  func.func @_project_kernel(%arg0: memref<256x32xf32, #tpu.memory_space<vmem>>, %arg1: memref<32x16xf32, #tpu.memory_space<vmem>>, %arg2: memref<32x16xf32, #tpu.memory_space<vmem>>, %arg3: memref<256x16xbf16, #tpu.memory_space<vmem>>, %arg4: memref<256x16xbf16, #tpu.memory_space<vmem>>) attributes {dimension_semantics = [], scalar_prefetch = 0 : i64, scratch_operands = 0 : i64, tpu.core_type = #tpu.core_type<tc>} {
    %c0 = arith.constant 0 : index
    %c0_0 = arith.constant 0 : index
    %0 = vector.load %arg0[%c0, %c0_0] : memref<256x32xf32, #tpu.memory_space<vmem>>, vector<256x32xf32>
    %c0_1 = arith.constant 0 : index
    %c0_2 = arith.constant 0 : index
    %1 = vector.load %arg1[%c0_1, %c0_2] : memref<32x16xf32, #tpu.memory_space<vmem>>, vector<32x16xf32>
    %cst = arith.constant dense<0.000000e+00> : vector<256x16xf32>
    %2 = tpu.matmul %0, %1, %cst {dimension_numbers = #tpu.dot_dimension_numbers<[1], [0], [0], [1], [0, 0, 1, 1], [], []>} : vector<256x32xf32>, vector<32x16xf32>, vector<256x16xf32> -> vector<256x16xf32>
    %3 = arith.truncf %2 : vector<256x16xf32> to vector<256x16xbf16>
    %c0_3 = arith.constant 0 : index
    %c0_4 = arith.constant 0 : index
    %4 = vector.load %arg3[%c0_3, %c0_4] : memref<256x16xbf16, #tpu.memory_space<vmem>>, vector<256x16xbf16>
    tpu.vector_store %arg3[%c0_3, %c0_4], %3 {strides = array<i32>} : memref<256x16xbf16, #tpu.memory_space<vmem>>, vector<256x16xbf16>,
    %c0_5 = arith.constant 0 : index
    %c0_6 = arith.constant 0 : index
    %5 = vector.load %arg2[%c0_5, %c0_6] : memref<32x16xf32, #tpu.memory_space<vmem>>, vector<32x16xf32>
    %cst_7 = arith.constant dense<0.000000e+00> : vector<256x16xf32>
    %6 = tpu.matmul %0, %5, %cst_7 {dimension_numbers = #tpu.dot_dimension_numbers<[1], [0], [0], [1], [0, 0, 1, 1], [], []>} : vector<256x32xf32>, vector<32x16xf32>, vector<256x16xf32> -> vector<256x16xf32>
    %7 = arith.truncf %6 : vector<256x16xf32> to vector<256x16xbf16>
    %c0_8 = arith.constant 0 : index
    %c0_9 = arith.constant 0 : index
    %8 = vector.load %arg4[%c0_8, %c0_9] : memref<256x16xbf16, #tpu.memory_space<vmem>>, vector<256x16xbf16>
    tpu.vector_store %arg4[%c0_8, %c0_9], %7 {strides = array<i32>} : memref<256x16xbf16, #tpu.memory_space<vmem>>, vector<256x16xbf16>,
    return
  }
}

</mosaic_0001>

<llo_original>
// kernel: tpu_custom_call.1
$region0: #{tpu_custom_call.1}
  #allocation0 [shape = 'u32[]', space=smem, size = 0x4, offset = 0x4, fixed_abs, tag = 'smem constant byte address 0x4 - core index']
  #allocation1 [shape = 'u32[72,128]{1,0:T(1,128)}', space=vmem, size = 0x9000, scoped, tag = 'internal scratch']
  %s0 = inlined_call_operand.vmem [shape: f32[256,32], index: 0, kind: input, shape index: {}]
  %s1 = inlined_call_operand.vmem [shape: f32[32,16], index: 1, kind: input, shape index: {}]
  %s2 = inlined_call_operand.vmem [shape: f32[32,16], index: 2, kind: input, shape index: {}]
  %s3 = inlined_call_operand.vmem [shape: bf16[256,16], index: 3, kind: output, shape index: {0}]
  %s4 = inlined_call_operand.vmem [shape: bf16[256,16], index: 4, kind: output, shape index: {1}]
  %5 = xla_tuple %s3, %s4
  %s6 = sld [smem:[#allocation0]]
  $region30: #{tpu_custom_call.1} parent=0
    _
  %s8 = ssub.s32 1, %s6
  %s9 = scalar_select 0, %s8, %s6
  // Predicated region
  $region2: #{tpu_custom_call.1} parent=0 // pred_check
    _
  $region3: #{tpu_custom_call.1} parent=0 // pred_check_branch
    %11 = sbr.rel (0) target = $region5
  $region4: #{tpu_custom_call.1} parent=0 // pred_region
    _
  $region5: #{tpu_custom_call.1} parent=0 // pred_fallthru
    _
  // Predicated region
  $region6: #{tpu_custom_call.1} parent=0 // pred_check
    _
  $region7: #{tpu_custom_call.1} parent=0 // pred_check_branch
    %13 = sbr.rel (0) target = $region9
  $region8: #{tpu_custom_call.1} parent=0 // pred_region
    _
  $region9: #{tpu_custom_call.1} parent=0 // pred_fallthru
    _
  // Predicated region
  $region10: #{tpu_custom_call.1} parent=0 // pred_check
    _
  $region11: #{tpu_custom_call.1} parent=0 // pred_check_branch
    %15 = sbr.rel (0) target = $region13
  $region12: #{tpu_custom_call.1} parent=0 // pred_region
    _
  $region13: #{tpu_custom_call.1} parent=0 // pred_fallthru
    _
  %v16 = vld [vmem:[%s0] sm:$0xff]
  %v17 = vld [vmem:[%s0 + $0x8] sm:$0xff]
  %v18 = vld [vmem:[%s0 + $0x10] sm:$0xff]
  %v19 = vld [vmem:[%s0 + $0x18] sm:$0xff]
  %v20 = vld [vmem:[%s0 + $0x20] sm:$0xff]
  %v21 = vld [vmem:[%s0 + $0x28] sm:$0xff]
  %v22 = vld [vmem:[%s0 + $0x30] sm:$0xff]
  %v23 = vld [vmem:[%s0 + $0x38] sm:$0xff]
  %v24 = vld [vmem:[%s0 + $0x40] sm:$0xff]
  %v25 = vld [vmem:[%s0 + $0x48] sm:$0xff]
  %v26 = vld [vmem:[%s0 + $0x50] sm:$0xff]
  %v27 = vld [vmem:[%s0 + $0x58] sm:$0xff]
  %v28 = vld [vmem:[%s0 + $0x60] sm:$0xff]
  %v29 = vld [vmem:[%s0 + $0x68] sm:$0xff]
  %v30 = vld [vmem:[%s0 + $0x70] sm:$0xff]
  %v31 = vld [vmem:[%s0 + $0x78] sm:$0xff]
  %v32 = vld [vmem:[%s0 + $0x80] sm:$0xff]
  %v33 = vld [vmem:[%s0 + $0x88] sm:$0xff]
  %v34 = vld [vmem:[%s0 + $0x90] sm:$0xff]
  %v35 = vld [vmem:[%s0 + $0x98] sm:$0xff]
  %v36 = vld [vmem:[%s0 + $0xa0] sm:$0xff]
  %v37 = vld [vmem:[%s0 + $0xa8] sm:$0xff]
  %v38 = vld [vmem:[%s0 + $0xb0] sm:$0xff]
  %v39 = vld [vmem:[%s0 + $0xb8] sm:$0xff]
  %v40 = vld [vmem:[%s0 + $0xc0] sm:$0xff]
  %v41 = vld [vmem:[%s0 + $0xc8] sm:$0xff]
  %v42 = vld [vmem:[%s0 + $0xd0] sm:$0xff]
  %v43 = vld [vmem:[%s0 + $0xd8] sm:$0xff]
  %v44 = vld [vmem:[%s0 + $0xe0] sm:$0xff]
  %v45 = vld [vmem:[%s0 + $0xe8] sm:$0xff]
  %v46 = vld [vmem:[%s0 + $0xf0] sm:$0xff]
  %v47 = vld [vmem:[%s0 + $0xf8] sm:$0xff]
  %v48 = vld [vmem:[%s1] sm:$0xff]
  %v49 = vld [vmem:[%s1 + $0x8] sm:$0xff]
  %v50 = vld [vmem:[%s1 + $0x10] sm:$0xff]
  %v51 = vld [vmem:[%s1 + $0x18] sm:$0xff]
  %vm52 = vcmask 261120
  %v54 = vsel %vm52, %v16, 0
  %v57 = vsel %vm52, %v17, 0
  %v60 = vsel %vm52, %v18, 0
  %v63 = vsel %vm52, %v19, 0
  %v66 = vsel %vm52, %v20, 0
  %v69 = vsel %vm52, %v21, 0
  %v72 = vsel %vm52, %v22, 0
  %v75 = vsel %vm52, %v23, 0
  %v78 = vsel %vm52, %v24, 0
  %v81 = vsel %vm52, %v25, 0
  %v84 = vsel %vm52, %v26, 0
  %v87 = vsel %vm52, %v27, 0
  %v90 = vsel %vm52, %v28, 0
  %v93 = vsel %vm52, %v29, 0
  %v96 = vsel %vm52, %v30, 0
  %v99 = vsel %vm52, %v31, 0
  %v102 = vsel %vm52, %v32, 0
  %v105 = vsel %vm52, %v33, 0
  %v108 = vsel %vm52, %v34, 0
  %v111 = vsel %vm52, %v35, 0
  %v114 = vsel %vm52, %v36, 0
  %v117 = vsel %vm52, %v37, 0
  %v120 = vsel %vm52, %v38, 0
  %v123 = vsel %vm52, %v39, 0
  %v126 = vsel %vm52, %v40, 0
  %v129 = vsel %vm52, %v41, 0
  %v132 = vsel %vm52, %v42, 0
  %v135 = vsel %vm52, %v43, 0
  %v138 = vsel %vm52, %v44, 0
  %v141 = vsel %vm52, %v45, 0
  %v144 = vsel %vm52, %v46, 0
  %v147 = vsel %vm52, %v47, 0
  %149 = vmatpush.msra.mxu0 0.0
  %150 = vmatpush.msra.mxu0 0.0
  %151 = vmatpush.msra.mxu0 0.0
  %152 = vmatpush.msra.mxu0 0.0
  %153 = vmatpush.msra.mxu0 0.0
  %154 = vmatpush.msra.mxu0 0.0
  %155 = vmatpush.msra.mxu0 0.0
  %156 = vmatpush.msra.mxu0 0.0
  %157 = vmatpush.msra.mxu0 0.0
  %158 = vmatpush.msra.mxu0 0.0
  %159 = vmatpush.msra.mxu0 0.0
  %160 = vmatpush.msra.mxu0 0.0
  %161 = vmatpush.msra.mxu0 %v51
  %162 = vmatpush.msra.mxu0 %v50
  %163 = vmatpush.msra.mxu0 %v49
  %164 = vmatpush.msra.mxu0 %v48
  %165 = vmatmul.f32.gmra.mxu0 %v54
  %v166 = vpop.f32.mrf.mxu0
  %v167 = vadd.f32 0.0, %v166
  %168 = vmatmul.f32.gmra.mxu0 %v57
  %v169 = vpop.f32.mrf.mxu0
  %v170 = vadd.f32 0.0, %v169
  %171 = vmatmul.f32.gmra.mxu0 %v60
  %v172 = vpop.f32.mrf.mxu0
  %v173 = vadd.f32 0.0, %v172
  %174 = vmatmul.f32.gmra.mxu0 %v63
  %v175 = vpop.f32.mrf.mxu0
  %v176 = vadd.f32 0.0, %v175
  %177 = vmatmul.f32.gmra.mxu0 %v66
  %v178 = vpop.f32.mrf.mxu0
  %v179 = vadd.f32 0.0, %v178
  %180 = vmatmul.f32.gmra.mxu0 %v69
  %v181 = vpop.f32.mrf.mxu0
  %v182 = vadd.f32 0.0, %v181
  %183 = vmatmul.f32.gmra.mxu0 %v72
  %v184 = vpop.f32.mrf.mxu0
  %v185 = vadd.f32 0.0, %v184
  %186 = vmatmul.f32.gmra.mxu0 %v75
  %v187 = vpop.f32.mrf.mxu0
  %v188 = vadd.f32 0.0, %v187
  %189 = vmatmul.f32.gmra.mxu0 %v78
  %v190 = vpop.f32.mrf.mxu0
  %v191 = vadd.f32 0.0, %v190
  %192 = vmatmul.f32.gmra.mxu0 %v81
  %v193 = vpop.f32.mrf.mxu0
  %v194 = vadd.f32 0.0, %v193
  %195 = vmatmul.f32.gmra.mxu0 %v84
  %v196 = vpop.f32.mrf.mxu0
  %v197 = vadd.f32 0.0, %v196
  %198 = vmatmul.f32.gmra.mxu0 %v87
  %v199 = vpop.f32.mrf.mxu0
  %v200 = vadd.f32 0.0, %v199
  %201 = vmatmul.f32.gmra.mxu0 %v90
  %v202 = vpop.f32.mrf.mxu0
  %v203 = vadd.f32 0.0, %v202
  %204 = vmatmul.f32.gmra.mxu0 %v93
  %v205 = vpop.f32.mrf.mxu0
  %v206 = vadd.f32 0.0, %v205
  %207 = vmatmul.f32.gmra.mxu0 %v96
  %v208 = vpop.f32.mrf.mxu0
  %v209 = vadd.f32 0.0, %v208
  %210 = vmatmul.f32.gmra.mxu0 %v99
  %v211 = vpop.f32.mrf.mxu0
  %v212 = vadd.f32 0.0, %v211
  %213 = vmatmul.f32.gmra.mxu0 %v102
  %v214 = vpop.f32.mrf.mxu0
  %v215 = vadd.f32 0.0, %v214
  %216 = vmatmul.f32.gmra.mxu0 %v105
  %v217 = vpop.f32.mrf.mxu0
  %v218 = vadd.f32 0.0, %v217
  %219 = vmatmul.f32.gmra.mxu0 %v108
  %v220 = vpop.f32.mrf.mxu0
  %v221 = vadd.f32 0.0, %v220
  %222 = vmatmul.f32.gmra.mxu0 %v111
  %v223 = vpop.f32.mrf.mxu0
  %v224 = vadd.f32 0.0, %v223
  %225 = vmatmul.f32.gmra.mxu0 %v114
  %v226 = vpop.f32.mrf.mxu0
  %v227 = vadd.f32 0.0, %v226
  %228 = vmatmul.f32.gmra.mxu0 %v117
  %v229 = vpop.f32.mrf.mxu0
  %v230 = vadd.f32 0.0, %v229
  %231 = vmatmul.f32.gmra.mxu0 %v120
  %v232 = vpop.f32.mrf.mxu0
  %v233 = vadd.f32 0.0, %v232
  %234 = vmatmul.f32.gmra.mxu0 %v123
  %v235 = vpop.f32.mrf.mxu0
  %v236 = vadd.f32 0.0, %v235
  %237 = vmatmul.f32.gmra.mxu0 %v126
  %v238 = vpop.f32.mrf.mxu0
  %v239 = vadd.f32 0.0, %v238
  %240 = vmatmul.f32.gmra.mxu0 %v129
  %v241 = vpop.f32.mrf.mxu0
  %v242 = vadd.f32 0.0, %v241
  %243 = vmatmul.f32.gmra.mxu0 %v132
  %v244 = vpop.f32.mrf.mxu0
  %v245 = vadd.f32 0.0, %v244
  %246 = vmatmul.f32.gmra.mxu0 %v135
  %v247 = vpop.f32.mrf.mxu0
  %v248 = vadd.f32 0.0, %v247
  %249 = vmatmul.f32.gmra.mxu0 %v138
  %v250 = vpop.f32.mrf.mxu0
  %v251 = vadd.f32 0.0, %v250
  %252 = vmatmul.f32.gmra.mxu0 %v141
  %v253 = vpop.f32.mrf.mxu0
  %v254 = vadd.f32 0.0, %v253
  %255 = vmatmul.f32.gmra.mxu0 %v144
  %v256 = vpop.f32.mrf.mxu0
  %v257 = vadd.f32 0.0, %v256
  %258 = vmatmul.f32.gmra.mxu0 %v147
  %v259 = vpop.f32.mrf.mxu0
  %v260 = vadd.f32 0.0, %v259
  %261 = vdwg.mxu0
  %v262 = vpack.c.bf16 %v167, %v167
  %v263 = vpack.c.bf16 %v170, %v170
  %v264 = vpack.c.bf16 %v173, %v173
  %v265 = vpack.c.bf16 %v176, %v176
  %v266 = vpack.c.bf16 %v179, %v179
  %v267 = vpack.c.bf16 %v182, %v182
  %v268 = vpack.c.bf16 %v185, %v185
  %v269 = vpack.c.bf16 %v188, %v188
  %v270 = vpack.c.bf16 %v191, %v191
  %v271 = vpack.c.bf16 %v194, %v194
  %v272 = vpack.c.bf16 %v197, %v197
  %v273 = vpack.c.bf16 %v200, %v200
  %v274 = vpack.c.bf16 %v203, %v203
  %v275 = vpack.c.bf16 %v206, %v206
  %v276 = vpack.c.bf16 %v209, %v209
  %v277 = vpack.c.bf16 %v212, %v212
  %v278 = vpack.c.bf16 %v215, %v215
  %v279 = vpack.c.bf16 %v218, %v218
  %v280 = vpack.c.bf16 %v221, %v221
  %v281 = vpack.c.bf16 %v224, %v224
  %v282 = vpack.c.bf16 %v227, %v227
  %v283 = vpack.c.bf16 %v230, %v230
  %v284 = vpack.c.bf16 %v233, %v233
  %v285 = vpack.c.bf16 %v236, %v236
  %v286 = vpack.c.bf16 %v239, %v239
  %v287 = vpack.c.bf16 %v242, %v242
  %v288 = vpack.c.bf16 %v245, %v245
  %v289 = vpack.c.bf16 %v248, %v248
  %v290 = vpack.c.bf16 %v251, %v251
  %v291 = vpack.c.bf16 %v254, %v254
  %v292 = vpack.c.bf16 %v257, %v257
  %v293 = vpack.c.bf16 %v260, %v260
  %vm294 = vcmask 125952
  %295 = vst.msk [vmem:[%s3] sm:$0xf] %vm294, %v262
  %296 = vst.msk [vmem:[%s3 + $0x4] sm:$0xf] %vm294, %v263
  %297 = vst.msk [vmem:[%s3 + $0x8] sm:$0xf] %vm294, %v264
  %298 = vst.msk [vmem:[%s3 + $0xc] sm:$0xf] %vm294, %v265
  %299 = vst.msk [vmem:[%s3 + $0x10] sm:$0xf] %vm294, %v266
  %300 = vst.msk [vmem:[%s3 + $0x14] sm:$0xf] %vm294, %v267
  %301 = vst.msk [vmem:[%s3 + $0x18] sm:$0xf] %vm294, %v268
  %302 = vst.msk [vmem:[%s3 + $0x1c] sm:$0xf] %vm294, %v269
  %303 = vst.msk [vmem:[%s3 + $0x20] sm:$0xf] %vm294, %v270
  %304 = vst.msk [vmem:[%s3 + $0x24] sm:$0xf] %vm294, %v271
  %305 = vst.msk [vmem:[%s3 + $0x28] sm:$0xf] %vm294, %v272
  %306 = vst.msk [vmem:[%s3 + $0x2c] sm:$0xf] %vm294, %v273
  %307 = vst.msk [vmem:[%s3 + $0x30] sm:$0xf] %vm294, %v274
  %308 = vst.msk [vmem:[%s3 + $0x34] sm:$0xf] %vm294, %v275
  %309 = vst.msk [vmem:[%s3 + $0x38] sm:$0xf] %vm294, %v276
  %310 = vst.msk [vmem:[%s3 + $0x3c] sm:$0xf] %vm294, %v277
  %311 = vst.msk [vmem:[%s3 + $0x40] sm:$0xf] %vm294, %v278
  %312 = vst.msk [vmem:[%s3 + $0x44] sm:$0xf] %vm294, %v279
  %313 = vst.msk [vmem:[%s3 + $0x48] sm:$0xf] %vm294, %v280
  %314 = vst.msk [vmem:[%s3 + $0x4c] sm:$0xf] %vm294, %v281
  %315 = vst.msk [vmem:[%s3 + $0x50] sm:$0xf] %vm294, %v282
  %316 = vst.msk [vmem:[%s3 + $0x54] sm:$0xf] %vm294, %v283
  %317 = vst.msk [vmem:[%s3 + $0x58] sm:$0xf] %vm294, %v284
  %318 = vst.msk [vmem:[%s3 + $0x5c] sm:$0xf] %vm294, %v285
  %319 = vst.msk [vmem:[%s3 + $0x60] sm:$0xf] %vm294, %v286
  %320 = vst.msk [vmem:[%s3 + $0x64] sm:$0xf] %vm294, %v287
  %321 = vst.msk [vmem:[%s3 + $0x68] sm:$0xf] %vm294, %v288
  %322 = vst.msk [vmem:[%s3 + $0x6c] sm:$0xf] %vm294, %v289
  %323 = vst.msk [vmem:[%s3 + $0x70] sm:$0xf] %vm294, %v290
  %324 = vst.msk [vmem:[%s3 + $0x74] sm:$0xf] %vm294, %v291
  %325 = vst.msk [vmem:[%s3 + $0x78] sm:$0xf] %vm294, %v292
  %326 = vst.msk [vmem:[%s3 + $0x7c] sm:$0xf] %vm294, %v293
  %v327 = vld [vmem:[%s2] sm:$0xff]
  %v328 = vld [vmem:[%s2 + $0x8] sm:$0xff]
  %v329 = vld [vmem:[%s2 + $0x10] sm:$0xff]
  %v330 = vld [vmem:[%s2 + $0x18] sm:$0xff]
  %331 = vmatpush.msra.mxu0 0.0
  %332 = vmatpush.msra.mxu0 0.0
  %333 = vmatpush.msra.mxu0 0.0
  %334 = vmatpush.msra.mxu0 0.0
  %335 = vmatpush.msra.mxu0 0.0
  %336 = vmatpush.msra.mxu0 0.0
  %337 = vmatpush.msra.mxu0 0.0
  %338 = vmatpush.msra.mxu0 0.0
  %339 = vmatpush.msra.mxu0 0.0
  %340 = vmatpush.msra.mxu0 0.0
  %341 = vmatpush.msra.mxu0 0.0
  %342 = vmatpush.msra.mxu0 0.0
  %343 = vmatpush.msra.mxu0 %v330
  %344 = vmatpush.msra.mxu0 %v329
  %345 = vmatpush.msra.mxu0 %v328
  %346 = vmatpush.msra.mxu0 %v327
  %347 = vmatmul.f32.gmra.mxu0 %v54
  %v348 = vpop.f32.mrf.mxu0
  %v349 = vadd.f32 0.0, %v348
  %350 = vmatmul.f32.gmra.mxu0 %v57
  %v351 = vpop.f32.mrf.mxu0
  %v352 = vadd.f32 0.0, %v351
  %353 = vmatmul.f32.gmra.mxu0 %v60
  %v354 = vpop.f32.mrf.mxu0
  %v355 = vadd.f32 0.0, %v354
  %356 = vmatmul.f32.gmra.mxu0 %v63
  %v357 = vpop.f32.mrf.mxu0
  %v358 = vadd.f32 0.0, %v357
  %359 = vmatmul.f32.gmra.mxu0 %v66
  %v360 = vpop.f32.mrf.mxu0
  %v361 = vadd.f32 0.0, %v360
  %362 = vmatmul.f32.gmra.mxu0 %v69
  %v363 = vpop.f32.mrf.mxu0
  %v364 = vadd.f32 0.0, %v363
  %365 = vmatmul.f32.gmra.mxu0 %v72
  %v366 = vpop.f32.mrf.mxu0
  %v367 = vadd.f32 0.0, %v366
  %368 = vmatmul.f32.gmra.mxu0 %v75
  %v369 = vpop.f32.mrf.mxu0
  %v370 = vadd.f32 0.0, %v369
  %371 = vmatmul.f32.gmra.mxu0 %v78
  %v372 = vpop.f32.mrf.mxu0
  %v373 = vadd.f32 0.0, %v372
  %374 = vmatmul.f32.gmra.mxu0 %v81
  %v375 = vpop.f32.mrf.mxu0
  %v376 = vadd.f32 0.0, %v375
  %377 = vmatmul.f32.gmra.mxu0 %v84
  %v378 = vpop.f32.mrf.mxu0
  %v379 = vadd.f32 0.0, %v378
  %380 = vmatmul.f32.gmra.mxu0 %v87
  %v381 = vpop.f32.mrf.mxu0
  %v382 = vadd.f32 0.0, %v381
  %383 = vmatmul.f32.gmra.mxu0 %v90
  %v384 = vpop.f32.mrf.mxu0
  %v385 = vadd.f32 0.0, %v384
  %386 = vmatmul.f32.gmra.mxu0 %v93
  %v387 = vpop.f32.mrf.mxu0
  %v388 = vadd.f32 0.0, %v387
  %389 = vmatmul.f32.gmra.mxu0 %v96
  %v390 = vpop.f32.mrf.mxu0
  %v391 = vadd.f32 0.0, %v390
  %392 = vmatmul.f32.gmra.mxu0 %v99
  %v393 = vpop.f32.mrf.mxu0
  %v394 = vadd.f32 0.0, %v393
  %395 = vmatmul.f32.gmra.mxu0 %v102
  %v396 = vpop.f32.mrf.mxu0
  %v397 = vadd.f32 0.0, %v396
  %398 = vmatmul.f32.gmra.mxu0 %v105
  %v399 = vpop.f32.mrf.mxu0
  %v400 = vadd.f32 0.0, %v399
  %401 = vmatmul.f32.gmra.mxu0 %v108
  %v402 = vpop.f32.mrf.mxu0
  %v403 = vadd.f32 0.0, %v402
  %404 = vmatmul.f32.gmra.mxu0 %v111
  %v405 = vpop.f32.mrf.mxu0
  %v406 = vadd.f32 0.0, %v405
  %407 = vmatmul.f32.gmra.mxu0 %v114
  %v408 = vpop.f32.mrf.mxu0
  %v409 = vadd.f32 0.0, %v408
  %410 = vmatmul.f32.gmra.mxu0 %v117
  %v411 = vpop.f32.mrf.mxu0
  %v412 = vadd.f32 0.0, %v411
  %413 = vmatmul.f32.gmra.mxu0 %v120
  %v414 = vpop.f32.mrf.mxu0
  %v415 = vadd.f32 0.0, %v414
  %416 = vmatmul.f32.gmra.mxu0 %v123
  %v417 = vpop.f32.mrf.mxu0
  %v418 = vadd.f32 0.0, %v417
  %419 = vmatmul.f32.gmra.mxu0 %v126
  %v420 = vpop.f32.mrf.mxu0
  %v421 = vadd.f32 0.0, %v420
  %422 = vmatmul.f32.gmra.mxu0 %v129
  %v423 = vpop.f32.mrf.mxu0
  %v424 = vadd.f32 0.0, %v423
  %425 = vmatmul.f32.gmra.mxu0 %v132
  %v426 = vpop.f32.mrf.mxu0
  %v427 = vadd.f32 0.0, %v426
  %428 = vmatmul.f32.gmra.mxu0 %v135
  %v429 = vpop.f32.mrf.mxu0
  %v430 = vadd.f32 0.0, %v429
  %431 = vmatmul.f32.gmra.mxu0 %v138
  %v432 = vpop.f32.mrf.mxu0
  %v433 = vadd.f32 0.0, %v432
  %434 = vmatmul.f32.gmra.mxu0 %v141
  %v435 = vpop.f32.mrf.mxu0
  %v436 = vadd.f32 0.0, %v435
  %437 = vmatmul.f32.gmra.mxu0 %v144
  %v438 = vpop.f32.mrf.mxu0
  %v439 = vadd.f32 0.0, %v438
  %440 = vmatmul.f32.gmra.mxu0 %v147
  %v441 = vpop.f32.mrf.mxu0
  %v442 = vadd.f32 0.0, %v441
  %443 = vdwg.mxu0
  %v444 = vpack.c.bf16 %v349, %v349
  %v445 = vpack.c.bf16 %v352, %v352
  %v446 = vpack.c.bf16 %v355, %v355
  %v447 = vpack.c.bf16 %v358, %v358
  %v448 = vpack.c.bf16 %v361, %v361
  %v449 = vpack.c.bf16 %v364, %v364
  %v450 = vpack.c.bf16 %v367, %v367
  %v451 = vpack.c.bf16 %v370, %v370
  %v452 = vpack.c.bf16 %v373, %v373
  %v453 = vpack.c.bf16 %v376, %v376
  %v454 = vpack.c.bf16 %v379, %v379
  %v455 = vpack.c.bf16 %v382, %v382
  %v456 = vpack.c.bf16 %v385, %v385
  %v457 = vpack.c.bf16 %v388, %v388
  %v458 = vpack.c.bf16 %v391, %v391
  %v459 = vpack.c.bf16 %v394, %v394
  %v460 = vpack.c.bf16 %v397, %v397
  %v461 = vpack.c.bf16 %v400, %v400
  %v462 = vpack.c.bf16 %v403, %v403
  %v463 = vpack.c.bf16 %v406, %v406
  %v464 = vpack.c.bf16 %v409, %v409
  %v465 = vpack.c.bf16 %v412, %v412
  %v466 = vpack.c.bf16 %v415, %v415
  %v467 = vpack.c.bf16 %v418, %v418
  %v468 = vpack.c.bf16 %v421, %v421
  %v469 = vpack.c.bf16 %v424, %v424
  %v470 = vpack.c.bf16 %v427, %v427
  %v471 = vpack.c.bf16 %v430, %v430
  %v472 = vpack.c.bf16 %v433, %v433
  %v473 = vpack.c.bf16 %v436, %v436
  %v474 = vpack.c.bf16 %v439, %v439
  %v475 = vpack.c.bf16 %v442, %v442
  %476 = vst.msk [vmem:[%s4] sm:$0xf] %vm294, %v444
  %477 = vst.msk [vmem:[%s4 + $0x4] sm:$0xf] %vm294, %v445
  %478 = vst.msk [vmem:[%s4 + $0x8] sm:$0xf] %vm294, %v446
  %479 = vst.msk [vmem:[%s4 + $0xc] sm:$0xf] %vm294, %v447
  %480 = vst.msk [vmem:[%s4 + $0x10] sm:$0xf] %vm294, %v448
  %481 = vst.msk [vmem:[%s4 + $0x14] sm:$0xf] %vm294, %v449
  %482 = vst.msk [vmem:[%s4 + $0x18] sm:$0xf] %vm294, %v450
  %483 = vst.msk [vmem:[%s4 + $0x1c] sm:$0xf] %vm294, %v451
  %484 = vst.msk [vmem:[%s4 + $0x20] sm:$0xf] %vm294, %v452
  %485 = vst.msk [vmem:[%s4 + $0x24] sm:$0xf] %vm294, %v453
  %486 = vst.msk [vmem:[%s4 + $0x28] sm:$0xf] %vm294, %v454
  %487 = vst.msk [vmem:[%s4 + $0x2c] sm:$0xf] %vm294, %v455
  %488 = vst.msk [vmem:[%s4 + $0x30] sm:$0xf] %vm294, %v456
  %489 = vst.msk [vmem:[%s4 + $0x34] sm:$0xf] %vm294, %v457
  %490 = vst.msk [vmem:[%s4 + $0x38] sm:$0xf] %vm294, %v458
  %491 = vst.msk [vmem:[%s4 + $0x3c] sm:$0xf] %vm294, %v459
  %492 = vst.msk [vmem:[%s4 + $0x40] sm:$0xf] %vm294, %v460
  %493 = vst.msk [vmem:[%s4 + $0x44] sm:$0xf] %vm294, %v461
  %494 = vst.msk [vmem:[%s4 + $0x48] sm:$0xf] %vm294, %v462
  %495 = vst.msk [vmem:[%s4 + $0x4c] sm:$0xf] %vm294, %v463
  %496 = vst.msk [vmem:[%s4 + $0x50] sm:$0xf] %vm294, %v464
  %497 = vst.msk [vmem:[%s4 + $0x54] sm:$0xf] %vm294, %v465
  %498 = vst.msk [vmem:[%s4 + $0x58] sm:$0xf] %vm294, %v466
  %499 = vst.msk [vmem:[%s4 + $0x5c] sm:$0xf] %vm294, %v467
  %500 = vst.msk [vmem:[%s4 + $0x60] sm:$0xf] %vm294, %v468
  %501 = vst.msk [vmem:[%s4 + $0x64] sm:$0xf] %vm294, %v469
  %502 = vst.msk [vmem:[%s4 + $0x68] sm:$0xf] %vm294, %v470
  %503 = vst.msk [vmem:[%s4 + $0x6c] sm:$0xf] %vm294, %v471
  %504 = vst.msk [vmem:[%s4 + $0x70] sm:$0xf] %vm294, %v472
  %505 = vst.msk [vmem:[%s4 + $0x74] sm:$0xf] %vm294, %v473
  %506 = vst.msk [vmem:[%s4 + $0x78] sm:$0xf] %vm294, %v474
  %507 = vst.msk [vmem:[%s4 + $0x7c] sm:$0xf] %vm294, %v475
  // Predicated region
  $region14: #{tpu_custom_call.1} parent=0 // pred_check
    _
  $region15: #{tpu_custom_call.1} parent=0 // pred_check_branch
    %509 = sbr.rel (0) target = $region17
  $region16: #{tpu_custom_call.1} parent=0 // pred_region
    _
  $region17: #{tpu_custom_call.1} parent=0 // pred_fallthru
    _
  // Predicated region
  $region18: #{tpu_custom_call.1} parent=0 // pred_check
    _
  $region19: #{tpu_custom_call.1} parent=0 // pred_check_branch
    %511 = sbr.rel (0) target = $region21
  $region20: #{tpu_custom_call.1} parent=0 // pred_region
    _
  $region21: #{tpu_custom_call.1} parent=0 // pred_fallthru
    _
  // Predicated region
  $region22: #{tpu_custom_call.1} parent=0 // pred_check
    _
  $region23: #{tpu_custom_call.1} parent=0 // pred_check_branch
    %513 = sbr.rel (0) target = $region25
  $region24: #{tpu_custom_call.1} parent=0 // pred_region
    _
  $region25: #{tpu_custom_call.1} parent=0 // pred_fallthru
    _
  // Predicated region
  $region26: #{tpu_custom_call.1} parent=0 // pred_check
    _
  $region27: #{tpu_custom_call.1} parent=0 // pred_check_branch
    %515 = sbr.rel (0) target = $region29
  $region28: #{tpu_custom_call.1} parent=0 // pred_region
    _
  $region29: #{tpu_custom_call.1} parent=0 // pred_fallthru
    _

</llo_original>
